<compile_context>
chip_gen: v6e
topology: v6e:2x2x1
jax: 0.10.0
libtpu: 0.0.40
codegen_flags: <defaults>
</compile_context>

<pallas_src>
import jax
import jax.numpy as jnp
from jax.experimental import pallas as pl
from jax.experimental.pallas import tpu as pltpu


# ----------------------------------------------------------------------------
# Pallas kernel: fused chain of (W @ h + b [+ ReLU]) over a (C, tile) block.
# ----------------------------------------------------------------------------
def _make_fcomb_kernel(n_layers):
    """n_layers is the total number of 1x1 convs (incl. the final no-ReLU one)."""

    def kernel(x_ref, z_ref, wf_ref, wz_ref, b1_ref, *rest):
        o_ref = rest[-1]
        wb_refs = rest[:-1]  # alternating (w, b) pairs for layers 1..n_layers-1

        x = x_ref[0].astype(jnp.float32)        # (C_f, T)   channels x spatial
        z_col = z_ref[0].astype(jnp.float32)    # (L, 1)     this batch's latent

        # First layer: h = W_f @ x + (W_z @ z + b1).  The z/bias term is a
        # per-batch (C1, 1) constant -- computed once per grid step, broadcast
        # over the lane (spatial) axis.
        zb = jnp.dot(wz_ref[...].astype(jnp.float32), z_col,
                     preferred_element_type=jnp.float32)
        zb = zb + b1_ref[...].astype(jnp.float32)              # (C1, 1)
        h = jnp.dot(wf_ref[...].astype(jnp.float32), x,
                    preferred_element_type=jnp.float32) + zb   # (C1, T)
        h = jnp.maximum(h, 0.0)

        # Remaining layers (middle ReLU layers + final no-ReLU layer).
        for li in range(n_layers - 1):
            w = wb_refs[2 * li][...].astype(jnp.float32)       # (C_out, C_in)
            b = wb_refs[2 * li + 1][...].astype(jnp.float32)   # (C_out, 1)
            h = jnp.dot(w, h, preferred_element_type=jnp.float32) + b
            if li < n_layers - 2:
                h = jnp.maximum(h, 0.0)

        o_ref[0] = h.astype(o_ref.dtype)                        # (num_classes, T)

    return kernel


# ----------------------------------------------------------------------------
# Fcomb forward: NCHW feature map + latent z -> NCHW logits.
# ----------------------------------------------------------------------------
def fcomb_forward(feature_map, z, weights, biases, *, tile_n=512):
    """feature_map: (B, C_f, H, W); z: (B, L).

    weights[i]: (C_out_i, C_in_i)  (1x1 conv weights, channels-first)
    biases[i] : (C_out_i, 1)
    """
    B, C_f, H, W = feature_map.shape
    L = z.shape[1]
    n_layers = len(weights)
    num_classes = weights[-1].shape[0]

    # Flatten spatial dims onto the lane axis; pad to a 128-multiple tile.
    S = H * W
    lane = 128
    tile = min(tile_n, ((S + lane - 1) // lane) * lane)
    tile = max(lane, (tile // lane) * lane)          # multiple of 128 (>=128)
    n_sp = (S + tile - 1) // tile
    S_pad = n_sp * tile

    x = feature_map.reshape(B, C_f, S)               # free reshape (contiguous)
    if S_pad != S:
        x = jnp.pad(x, ((0, 0), (0, 0), (0, S_pad - S)))

    z3 = z.reshape(B, L, 1)                          # (B, L, 1) tiny per-batch block

    # Split first-layer weight into feature-map part and latent part.
    w0 = weights[0]                                  # (C1, C_f + L)
    wf = w0[:, :C_f]
    wz = w0[:, C_f:]
    b1 = biases[0]                                   # (C1, 1)

    args = [x, z3, wf, wz, b1]
    in_specs = [
        pl.BlockSpec((1, C_f, tile), lambda b, s: (b, 0, s)),   # activation tile
        pl.BlockSpec((1, L, 1), lambda b, s: (b, 0, 0)),        # this batch's z
        pl.BlockSpec(wf.shape, lambda b, s: (0, 0)),            # resident weights
        pl.BlockSpec(wz.shape, lambda b, s: (0, 0)),
        pl.BlockSpec(b1.shape, lambda b, s: (0, 0)),
    ]
    for w, bb in zip(weights[1:], biases[1:]):
        in_specs.append(pl.BlockSpec(w.shape, lambda b, s: (0, 0)))
        in_specs.append(pl.BlockSpec(bb.shape, lambda b, s: (0, 0)))
        args.append(w)
        args.append(bb)

    out = pl.pallas_call(
        _make_fcomb_kernel(n_layers),
        out_shape=jax.ShapeDtypeStruct((B, num_classes, S_pad), feature_map.dtype),
        grid_spec=pltpu.PrefetchScalarGridSpec(
            num_scalar_prefetch=0,
            grid=(B, n_sp),
            in_specs=in_specs,
            out_specs=pl.BlockSpec((1, num_classes, tile), lambda b, s: (b, 0, s)),
        ),
        compiler_params=pltpu.CompilerParams(
            dimension_semantics=("parallel", "parallel")),
    )(*args)

    if S_pad != S:
        out = out[:, :, :S]                          # drop dead padded columns
    return out.reshape(B, num_classes, H, W)         # already NCHW


# ----------------------------------------------------------------------------
# Deterministic parameter init (kaiming-normal weights + tiny bias), stored
# channels-first: w (C_out, C_in), b (C_out, 1).
# ----------------------------------------------------------------------------
def init_fcomb_params(key, num_filters, latent_dim, num_classes, no_convs_fcomb):
    dims = [num_filters[0] + latent_dim]
    dims += [num_filters[1]] * (no_convs_fcomb - 1)  # first conv + middle convs
    dims += [num_classes]                            # last layer

    weights, biases = [], []
    for i in range(len(dims) - 1):
        key, kw, kb = jax.random.split(key, 3)
        fan_in = dims[i]
        std = (2.0 / fan_in) ** 0.5                  # kaiming normal, fan_in, relu
        w = jax.random.normal(kw, (dims[i + 1], dims[i]), jnp.float32) * std
        b = jax.random.normal(kb, (dims[i + 1], 1), jnp.float32) * 0.001
        weights.append(w)
        biases.append(b)
    return weights, biases


# ----------------------------------------------------------------------------
if __name__ == "__main__":
    key = jax.random.PRNGKey(0)

    # Small shapes consistent with Fcomb's forward.
    B, H, W = 2, 32, 32
    num_filters = [8, 16]      # only [0] and [1] are used by Fcomb
    latent_dim = 4
    num_classes = 2
    no_convs_fcomb = 3         # conv+ReLU, conv+ReLU, last conv

    key, kx, kz, kp = jax.random.split(key, 4)
    feature_map = jax.random.normal(kx, (B, num_filters[0], H, W), jnp.float32)
    z = jax.random.normal(kz, (B, latent_dim), jnp.float32)

    weights, biases = init_fcomb_params(
        kp, num_filters, latent_dim, num_classes, no_convs_fcomb)

    out = fcomb_forward(feature_map, z, weights, biases)
    out = jax.block_until_ready(out)

    assert out.shape == (B, num_classes, H, W), out.shape

    # Reference check in plain JAX (1x1 convs == per-pixel linear layers).
    z_tiled = jnp.broadcast_to(z[:, :, None, None], (B, latent_dim, H, W))
    x_cat = jnp.concatenate([feature_map, z_tiled], axis=1)
    h = x_cat.reshape(B, num_filters[0] + latent_dim, H * W)
    for li, (w, b) in enumerate(zip(weights, biases)):
        h = jnp.einsum('oc,bcs->bos', w, h) + b[None]
        if li < len(weights) - 1:
            h = jnp.maximum(h, 0.0)
    ref = h.reshape(B, num_classes, H, W)
    assert jnp.allclose(out, ref, atol=1e-4, rtol=1e-4)

    print("KERNEL_OK")
</pallas_src>

<mosaic_0001>
module attributes {stable_mosaic.version = 11 : i64} {
  func.func @kernel(%arg0: i32, %arg1: i32, %arg2: memref<1x8x512xf32, #tpu.memory_space<vmem>>, %arg3: memref<1x4x1xf32, #tpu.memory_space<vmem>>, %arg4: memref<16x8xf32, #tpu.memory_space<vmem>>, %arg5: memref<16x4xf32, #tpu.memory_space<vmem>>, %arg6: memref<16x1xf32, #tpu.memory_space<vmem>>, %arg7: memref<16x16xf32, #tpu.memory_space<vmem>>, %arg8: memref<16x1xf32, #tpu.memory_space<vmem>>, %arg9: memref<2x16xf32, #tpu.memory_space<vmem>>, %arg10: memref<2x1xf32, #tpu.memory_space<vmem>>, %arg11: memref<1x2x512xf32, #tpu.memory_space<vmem>>) attributes {dimension_semantics = [#tpu.dimension_semantics<parallel>, #tpu.dimension_semantics<parallel>], iteration_bounds = array<i64: 2, 2>, scalar_prefetch = 0 : i64, scratch_operands = 0 : i64, tpu.core_type = #tpu.core_type<tc>, window_params = [{transform_indices = @transform_0, window_bounds = array<i64: 1, 8, 512>}, {transform_indices = @transform_1, window_bounds = array<i64: 1, 4, 1>}, {pipeline_mode = #tpu.pipeline_mode<synchronous>, transform_indices = @transform_2, window_bounds = array<i64: 16, 8>}, {pipeline_mode = #tpu.pipeline_mode<synchronous>, transform_indices = @transform_3, window_bounds = array<i64: 16, 4>}, {pipeline_mode = #tpu.pipeline_mode<synchronous>, transform_indices = @transform_4, window_bounds = array<i64: 16, 1>}, {pipeline_mode = #tpu.pipeline_mode<synchronous>, transform_indices = @transform_5, window_bounds = array<i64: 16, 16>}, {pipeline_mode = #tpu.pipeline_mode<synchronous>, transform_indices = @transform_6, window_bounds = array<i64: 16, 1>}, {pipeline_mode = #tpu.pipeline_mode<synchronous>, transform_indices = @transform_7, window_bounds = array<i64: 2, 16>}, {pipeline_mode = #tpu.pipeline_mode<synchronous>, transform_indices = @transform_8, window_bounds = array<i64: 2, 1>}, {transform_indices = @transform_9, window_bounds = array<i64: 1, 2, 512>}]} {
    %c0 = arith.constant 0 : index
    %c0_0 = arith.constant 0 : index
    %c0_1 = arith.constant 0 : index
    %0 = vector.load %arg2[%c0, %c0_0, %c0_1] : memref<1x8x512xf32, #tpu.memory_space<vmem>>, vector<1x8x512xf32>
    %1 = vector.shape_cast %0 : vector<1x8x512xf32> to vector<8x512xf32>
    %c0_2 = arith.constant 0 : index
    %c0_3 = arith.constant 0 : index
    %c0_4 = arith.constant 0 : index
    %2 = vector.load %arg3[%c0_2, %c0_3, %c0_4] : memref<1x4x1xf32, #tpu.memory_space<vmem>>, vector<1x4x1xf32>
    %3 = vector.shape_cast %2 : vector<1x4x1xf32> to vector<4x1xf32>
    %c0_5 = arith.constant 0 : index
    %c0_6 = arith.constant 0 : index
    %4 = vector.load %arg5[%c0_5, %c0_6] : memref<16x4xf32, #tpu.memory_space<vmem>>, vector<16x4xf32>
    %cst = arith.constant dense<0.000000e+00> : vector<16x1xf32>
    %5 = tpu.matmul %4, %3, %cst {dimension_numbers = #tpu.dot_dimension_numbers<[1], [0], [0], [1], [0, 0, 1, 1], [], []>} : vector<16x4xf32>, vector<4x1xf32>, vector<16x1xf32> -> vector<16x1xf32>
    %c0_7 = arith.constant 0 : index
    %c0_8 = arith.constant 0 : index
    %6 = vector.load %arg6[%c0_7, %c0_8] : memref<16x1xf32, #tpu.memory_space<vmem>>, vector<16x1xf32>
    %7 = arith.addf %5, %6 : vector<16x1xf32>
    %c0_9 = arith.constant 0 : index
    %c0_10 = arith.constant 0 : index
    %8 = vector.load %arg4[%c0_9, %c0_10] : memref<16x8xf32, #tpu.memory_space<vmem>>, vector<16x8xf32>
    %cst_11 = arith.constant dense<0.000000e+00> : vector<16x512xf32>
    %9 = tpu.matmul %8, %1, %cst_11 {dimension_numbers = #tpu.dot_dimension_numbers<[1], [0], [0], [1], [0, 0, 1, 1], [], []>} : vector<16x8xf32>, vector<8x512xf32>, vector<16x512xf32> -> vector<16x512xf32>
    %10 = vector.broadcast %7 : vector<16x1xf32> to vector<16x512xf32>
    %11 = arith.addf %9, %10 : vector<16x512xf32>
    %cst_12 = arith.constant 0.000000e+00 : f32
    %12 = vector.broadcast %cst_12 : f32 to vector<16x512xf32>
    %13 = arith.maximumf %11, %12 : vector<16x512xf32>
    %c0_13 = arith.constant 0 : index
    %c0_14 = arith.constant 0 : index
    %14 = vector.load %arg7[%c0_13, %c0_14] : memref<16x16xf32, #tpu.memory_space<vmem>>, vector<16x16xf32>
    %c0_15 = arith.constant 0 : index
    %c0_16 = arith.constant 0 : index
    %15 = vector.load %arg8[%c0_15, %c0_16] : memref<16x1xf32, #tpu.memory_space<vmem>>, vector<16x1xf32>
    %cst_17 = arith.constant dense<0.000000e+00> : vector<16x512xf32>
    %16 = tpu.matmul %14, %13, %cst_17 {dimension_numbers = #tpu.dot_dimension_numbers<[1], [0], [0], [1], [0, 0, 1, 1], [], []>} : vector<16x16xf32>, vector<16x512xf32>, vector<16x512xf32> -> vector<16x512xf32>
    %17 = vector.broadcast %15 : vector<16x1xf32> to vector<16x512xf32>
    %18 = arith.addf %16, %17 : vector<16x512xf32>
    %cst_18 = arith.constant 0.000000e+00 : f32
    %19 = vector.broadcast %cst_18 : f32 to vector<16x512xf32>
    %20 = arith.maximumf %18, %19 : vector<16x512xf32>
    %c0_19 = arith.constant 0 : index
    %c0_20 = arith.constant 0 : index
    %21 = vector.load %arg9[%c0_19, %c0_20] : memref<2x16xf32, #tpu.memory_space<vmem>>, vector<2x16xf32>
    %c0_21 = arith.constant 0 : index
    %c0_22 = arith.constant 0 : index
    %22 = vector.load %arg10[%c0_21, %c0_22] : memref<2x1xf32, #tpu.memory_space<vmem>>, vector<2x1xf32>
    %cst_23 = arith.constant dense<0.000000e+00> : vector<2x512xf32>
    %23 = tpu.matmul %21, %20, %cst_23 {dimension_numbers = #tpu.dot_dimension_numbers<[1], [0], [0], [1], [0, 0, 1, 1], [], []>} : vector<2x16xf32>, vector<16x512xf32>, vector<2x512xf32> -> vector<2x512xf32>
    %24 = vector.broadcast %22 : vector<2x1xf32> to vector<2x512xf32>
    %25 = arith.addf %23, %24 : vector<2x512xf32>
    %c0_24 = arith.constant 0 : index
    %c0_25 = arith.constant 0 : index
    %c0_26 = arith.constant 0 : index
    %26 = vector.load %arg11[%c0_24, %c0_25, %c0_26] : memref<1x2x512xf32, #tpu.memory_space<vmem>>, vector<1x2x512xf32>
    %27 = vector.shape_cast %26 : vector<1x2x512xf32> to vector<2x512xf32>
    %28 = vector.shape_cast %25 : vector<2x512xf32> to vector<1x2x512xf32>
    tpu.vector_store %arg11[%c0_24, %c0_25, %c0_26], %28 {strides = array<i32>} : memref<1x2x512xf32, #tpu.memory_space<vmem>>, vector<1x2x512xf32>,
    return
  }
  func.func @transform_0(%arg0: i32, %arg1: i32) -> (i32, i32, i32) {
    %c0_i32 = arith.constant 0 : i32
    %c0_i32_0 = arith.constant 0 : i32
    return %arg0, %c0_i32, %arg1 : i32, i32, i32
  }
  func.func @transform_1(%arg0: i32, %arg1: i32) -> (i32, i32, i32) {
    %c0_i32 = arith.constant 0 : i32
    %c0_i32_0 = arith.constant 0 : i32
    %c0_i32_1 = arith.constant 0 : i32
    return %arg0, %c0_i32, %c0_i32_0 : i32, i32, i32
  }
  func.func @transform_2(%arg0: i32, %arg1: i32) -> (i32, i32) {
    %c0_i32 = arith.constant 0 : i32
    %c0_i32_0 = arith.constant 0 : i32
    %c0_i32_1 = arith.constant 0 : i32
    return %c0_i32, %c0_i32_0 : i32, i32
  }
  func.func @transform_3(%arg0: i32, %arg1: i32) -> (i32, i32) {
    %c0_i32 = arith.constant 0 : i32
    %c0_i32_0 = arith.constant 0 : i32
    %c0_i32_1 = arith.constant 0 : i32
    return %c0_i32, %c0_i32_0 : i32, i32
  }
  func.func @transform_4(%arg0: i32, %arg1: i32) -> (i32, i32) {
    %c0_i32 = arith.constant 0 : i32
    %c0_i32_0 = arith.constant 0 : i32
    %c0_i32_1 = arith.constant 0 : i32
    return %c0_i32, %c0_i32_0 : i32, i32
  }
  func.func @transform_5(%arg0: i32, %arg1: i32) -> (i32, i32) {
    %c0_i32 = arith.constant 0 : i32
    %c0_i32_0 = arith.constant 0 : i32
    %c0_i32_1 = arith.constant 0 : i32
    return %c0_i32, %c0_i32_0 : i32, i32
  }
  func.func @transform_6(%arg0: i32, %arg1: i32) -> (i32, i32) {
    %c0_i32 = arith.constant 0 : i32
    %c0_i32_0 = arith.constant 0 : i32
    %c0_i32_1 = arith.constant 0 : i32
    return %c0_i32, %c0_i32_0 : i32, i32
  }
  func.func @transform_7(%arg0: i32, %arg1: i32) -> (i32, i32) {
    %c0_i32 = arith.constant 0 : i32
    %c0_i32_0 = arith.constant 0 : i32
    %c0_i32_1 = arith.constant 0 : i32
    return %c0_i32, %c0_i32_0 : i32, i32
  }
  func.func @transform_8(%arg0: i32, %arg1: i32) -> (i32, i32) {
    %c0_i32 = arith.constant 0 : i32
    %c0_i32_0 = arith.constant 0 : i32
    %c0_i32_1 = arith.constant 0 : i32
    return %c0_i32, %c0_i32_0 : i32, i32
  }
  func.func @transform_9(%arg0: i32, %arg1: i32) -> (i32, i32, i32) {
    %c0_i32 = arith.constant 0 : i32
    %c0_i32_0 = arith.constant 0 : i32
    return %arg0, %c0_i32, %arg1 : i32, i32, i32
  }
}

</mosaic_0001>

<llo_original>
// kernel: tpu_custom_call.1
$region0: #{tpu_custom_call.1}
  #allocation0 [shape = 'u32[]', space=smem, size = 0x4, offset = 0x4, fixed_abs, tag = 'smem constant byte address 0x4 - core index']
  #allocation1 [shape = 'u32[144,128]{1,0:T(1,128)}', space=vmem, size = 0x12000, scoped, tag = 'internal scratch']
  %s0 = inlined_call_operand.hbm [shape: f32[2,8,1024], index: 0, kind: input, shape index: {}]
  %s1 = inlined_call_operand.vmem [shape: f32[2,4,1], index: 1, kind: input, shape index: {}]
  %s2 = inlined_call_operand.vmem [shape: f32[16,8], index: 2, kind: input, shape index: {}]
  %s3 = inlined_call_operand.vmem [shape: f32[16,4], index: 3, kind: input, shape index: {}]
  %s4 = inlined_call_operand.vmem [shape: f32[16,1], index: 4, kind: input, shape index: {}]
  %s5 = inlined_call_operand.vmem [shape: f32[16,16], index: 5, kind: input, shape index: {}]
  %s6 = inlined_call_operand.vmem [shape: f32[16,1], index: 6, kind: input, shape index: {}]
  %s7 = inlined_call_operand.vmem [shape: f32[2,16], index: 7, kind: input, shape index: {}]
  %s8 = inlined_call_operand.vmem [shape: f32[2,1], index: 8, kind: input, shape index: {}]
  %s9 = inlined_call_operand.hbm [shape: f32[2,2,1024], index: 9, kind: output, shape index: {}]
  %s10 = sld [smem:[#allocation0]]
  $region73: #{tpu_custom_call.1} parent=0
    _
  %s12 = ssub.s32 1, %s10
  %s13 = scalar_select 0, %s12, %s10
  $region1: #{tpu_custom_call.1} parent=0
    #allocation2 [shape = 'u8[32768]{0}', space=vmem, size = 0x8000, scoped, tag = 'input window, operand 0']
    #allocation3 [shape = 's32[2]{0}', space=sflag, size = 0x8, scoped, tag = 'scoped memory for tpu_custom_call.1']
    #allocation4 [shape = 's32[2]{0}', space=sflag, size = 0x8, scoped, tag = 'scoped memory for tpu_custom_call.1']
    #allocation5 [shape = 'u8[8192]{0}', space=vmem, size = 0x2000, scoped, tag = 'output window, operand 0']
    %14 = vsyncpa [#allocation3], 0
    %s15 = scalar_lea.sflag [#allocation3], 1
    %16 = vsyncpa %s15, 0
    %17 = vsyncpa [#allocation4], 0
    %s18 = scalar_lea.sflag [#allocation4], 1
    %19 = vsyncpa %s18, 0
    loop: start=0, step=1, limit=6
    $region2: #{tpu_custom_call.1} parent=1 // loop_pre_header
      _
    $region3: #{tpu_custom_call.1} parent=1 // loop_header
      %s21 = sphi 0, %s25
      %p22 = scmp.ge.s32.totalorder %s21, 6
      %s28 = sphi 0, %s40
      %s29 = sphi 0, %s36
      %s30 = sphi 0, %s28
      %s31 = sphi 0, %s29
      %s32 = sphi 0, %s30
      %s33 = sphi 0, %s31
      %s45 = sphi 0, %s47
      %s48 = sphi 0, %s45
      %s49 = sphi 0, %s48
      %s65 = sphi 0, %s49
      %s71 = sphi 0, %s73
      %s74 = sphi 0, %s71
      %s75 = sphi 0, %s74
      %s91 = sphi 0, %s75
      %s95 = sphi 0, %s95
      %s97 = sphi 0, %s95
      %s98 = sphi 0, %s97
      %s112 = sphi 0, %s98
      %s116 = sphi 0, %s116
      %s118 = sphi 0, %s116
      %s119 = sphi 0, %s118
      %s133 = sphi 0, %s119
      %s137 = sphi 0, %s137
      %s139 = sphi 0, %s137
      %s140 = sphi 0, %s139
      %s154 = sphi 0, %s140
      %s158 = sphi 0, %s158
      %s160 = sphi 0, %s158
      %s161 = sphi 0, %s160
      %s175 = sphi 0, %s161
      %s179 = sphi 0, %s179
      %s181 = sphi 0, %s179
      %s182 = sphi 0, %s181
      %s196 = sphi 0, %s182
      %s200 = sphi 0, %s200
      %s202 = sphi 0, %s200
      %s203 = sphi 0, %s202
      %s217 = sphi 0, %s203
      %s221 = sphi 0, %s221
      %s223 = sphi 0, %s221
      %s224 = sphi 0, %s223
      %s238 = sphi 0, %s224
      %s246 = sphi 0, %s248
      %s249 = sphi 0, %s246
      %s250 = sphi 0, %s249
      %s266 = sphi 0, %s250
    $region4: #{tpu_custom_call.1} parent=1 // loop_header_branch
      %24 = sbr.rel (%p22) target = $region8
    $region5: #{tpu_custom_call.1} parent=1 // loop_body
      %s26 = ssub.s32 %s21, 1
      %s27 = ssub.s32 %s21, 2
      %s34 = sadd.s32 1, %s29
      %p35 = scmp.ge.s32.totalorder %s34, 2
      %s36 = scalar_select %p35, 0, %s34
      %s37 = sadd.s32 1, %s28
      %s38 = scalar_select %p35, %s37, %s28
      %p39 = scmp.ge.s32.totalorder %s38, 2
      %s40 = scalar_select %p39, 0, %s38
      %s41 = ssub.s32 %s28, %s40
      %s42 = ssub.s32 %s29, %s36
      %s43 = sor.u32 %s41, %s42
      %p44 = scmp.eq.s32.totalorder %s43, 0
      %s46 = sadd.s32 %s45, 1
      %s47 = scalar_select %p44, %s45, %s46
      %p50 = pneg %p44
      %p51 = scmp.eq.s32.totalorder %s21, 3
      %p52 = por %p50, %p51
      %p53 = scmp.ne.s32.totalorder %s45, %s48
      %p54 = scmp.eq.s32.totalorder %s21, 0
      %p55 = por %p53, %p54
      %p56 = scmp.ne.s32.totalorder %s45, %s48
      %p57 = scmp.eq.s32.totalorder %s26, 3
      %p58 = por %p56, %p57
      %p59 = scmp.ne.s32.totalorder %s48, %s49
      %p60 = scmp.eq.s32.totalorder %s26, 0
      %p61 = por %p59, %p60
      %p62 = scmp.ne.s32.totalorder %s48, %s49
      %p63 = scmp.eq.s32.totalorder %s27, 3
      %p64 = por %p62, %p63
      %p66 = scmp.ne.s32.totalorder %s49, %s65
      %p67 = scmp.eq.s32.totalorder %s27, 0
      %p68 = por %p66, %p67
      %s69 = ssub.s32 %s28, %s40
      %p70 = scmp.eq.s32.totalorder %s69, 0
      %s72 = sadd.s32 %s71, 1
      %s73 = scalar_select %p70, %s71, %s72
      %p76 = pneg %p70
      %p77 = scmp.eq.s32.totalorder %s21, 3
      %p78 = por %p76, %p77
      %p79 = scmp.ne.s32.totalorder %s71, %s74
      %p80 = scmp.eq.s32.totalorder %s21, 0
      %p81 = por %p79, %p80
      %p82 = scmp.ne.s32.totalorder %s71, %s74
      %p83 = scmp.eq.s32.totalorder %s26, 3
      %p84 = por %p82, %p83
      %p85 = scmp.ne.s32.totalorder %s74, %s75
      %p86 = scmp.eq.s32.totalorder %s26, 0
      %p87 = por %p85, %p86
      %p88 = scmp.ne.s32.totalorder %s74, %s75
      %p89 = scmp.eq.s32.totalorder %s27, 3
      %p90 = por %p88, %p89
      %p92 = scmp.ne.s32.totalorder %s75, %s91
      %p93 = scmp.eq.s32.totalorder %s27, 0
      %p94 = por %p92, %p93
      %s96 = sadd.s32 %s95, 1
      %p99 = scmp.eq.s32.totalorder %s21, 3
      %p100 = scmp.ne.s32.totalorder %s95, %s97
      %p101 = scmp.eq.s32.totalorder %s21, 0
      %p102 = por %p100, %p101
      %p103 = scmp.ne.s32.totalorder %s95, %s97
      %p104 = scmp.eq.s32.totalorder %s26, 3
      %p105 = por %p103, %p104
      %p106 = scmp.ne.s32.totalorder %s97, %s98
      %p107 = scmp.eq.s32.totalorder %s26, 0
      %p108 = por %p106, %p107
      %p109 = scmp.ne.s32.totalorder %s97, %s98
      %p110 = scmp.eq.s32.totalorder %s27, 3
      %p111 = por %p109, %p110
      %p113 = scmp.ne.s32.totalorder %s98, %s112
      %p114 = scmp.eq.s32.totalorder %s27, 0
      %p115 = por %p113, %p114
      %s117 = sadd.s32 %s116, 1
      %p120 = scmp.eq.s32.totalorder %s21, 3
      %p121 = scmp.ne.s32.totalorder %s116, %s118
      %p122 = scmp.eq.s32.totalorder %s21, 0
      %p123 = por %p121, %p122
      %p124 = scmp.ne.s32.totalorder %s116, %s118
      %p125 = scmp.eq.s32.totalorder %s26, 3
      %p126 = por %p124, %p125
      %p127 = scmp.ne.s32.totalorder %s118, %s119
      %p128 = scmp.eq.s32.totalorder %s26, 0
      %p129 = por %p127, %p128
      %p130 = scmp.ne.s32.totalorder %s118, %s119
      %p131 = scmp.eq.s32.totalorder %s27, 3
      %p132 = por %p130, %p131
      %p134 = scmp.ne.s32.totalorder %s119, %s133
      %p135 = scmp.eq.s32.totalorder %s27, 0
      %p136 = por %p134, %p135
      %s138 = sadd.s32 %s137, 1
      %p141 = scmp.eq.s32.totalorder %s21, 3
      %p142 = scmp.ne.s32.totalorder %s137, %s139
      %p143 = scmp.eq.s32.totalorder %s21, 0
      %p144 = por %p142, %p143
      %p145 = scmp.ne.s32.totalorder %s137, %s139
      %p146 = scmp.eq.s32.totalorder %s26, 3
      %p147 = por %p145, %p146
      %p148 = scmp.ne.s32.totalorder %s139, %s140
      %p149 = scmp.eq.s32.totalorder %s26, 0
      %p150 = por %p148, %p149
      %p151 = scmp.ne.s32.totalorder %s139, %s140
      %p152 = scmp.eq.s32.totalorder %s27, 3
      %p153 = por %p151, %p152
      %p155 = scmp.ne.s32.totalorder %s140, %s154
      %p156 = scmp.eq.s32.totalorder %s27, 0
      %p157 = por %p155, %p156
      %s159 = sadd.s32 %s158, 1
      %p162 = scmp.eq.s32.totalorder %s21, 3
      %p163 = scmp.ne.s32.totalorder %s158, %s160
      %p164 = scmp.eq.s32.totalorder %s21, 0
      %p165 = por %p163, %p164
      %p166 = scmp.ne.s32.totalorder %s158, %s160
      %p167 = scmp.eq.s32.totalorder %s26, 3
      %p168 = por %p166, %p167
      %p169 = scmp.ne.s32.totalorder %s160, %s161
      %p170 = scmp.eq.s32.totalorder %s26, 0
      %p171 = por %p169, %p170
      %p172 = scmp.ne.s32.totalorder %s160, %s161
      %p173 = scmp.eq.s32.totalorder %s27, 3
      %p174 = por %p172, %p173
      %p176 = scmp.ne.s32.totalorder %s161, %s175
      %p177 = scmp.eq.s32.totalorder %s27, 0
      %p178 = por %p176, %p177
      %s180 = sadd.s32 %s179, 1
      %p183 = scmp.eq.s32.totalorder %s21, 3
      %p184 = scmp.ne.s32.totalorder %s179, %s181
      %p185 = scmp.eq.s32.totalorder %s21, 0
      %p186 = por %p184, %p185
      %p187 = scmp.ne.s32.totalorder %s179, %s181
      %p188 = scmp.eq.s32.totalorder %s26, 3
      %p189 = por %p187, %p188
      %p190 = scmp.ne.s32.totalorder %s181, %s182
      %p191 = scmp.eq.s32.totalorder %s26, 0
      %p192 = por %p190, %p191
      %p193 = scmp.ne.s32.totalorder %s181, %s182
      %p194 = scmp.eq.s32.totalorder %s27, 3
      %p195 = por %p193, %p194
      %p197 = scmp.ne.s32.totalorder %s182, %s196
      %p198 = scmp.eq.s32.totalorder %s27, 0
      %p199 = por %p197, %p198
      %s201 = sadd.s32 %s200, 1
      %p204 = scmp.eq.s32.totalorder %s21, 3
      %p205 = scmp.ne.s32.totalorder %s200, %s202
      %p206 = scmp.eq.s32.totalorder %s21, 0
      %p207 = por %p205, %p206
      %p208 = scmp.ne.s32.totalorder %s200, %s202
      %p209 = scmp.eq.s32.totalorder %s26, 3
      %p210 = por %p208, %p209
      %p211 = scmp.ne.s32.totalorder %s202, %s203
      %p212 = scmp.eq.s32.totalorder %s26, 0
      %p213 = por %p211, %p212
      %p214 = scmp.ne.s32.totalorder %s202, %s203
      %p215 = scmp.eq.s32.totalorder %s27, 3
      %p216 = por %p214, %p215
      %p218 = scmp.ne.s32.totalorder %s203, %s217
      %p219 = scmp.eq.s32.totalorder %s27, 0
      %p220 = por %p218, %p219
      %s222 = sadd.s32 %s221, 1
      %p225 = scmp.eq.s32.totalorder %s21, 3
      %p226 = scmp.ne.s32.totalorder %s221, %s223
      %p227 = scmp.eq.s32.totalorder %s21, 0
      %p228 = por %p226, %p227
      %p229 = scmp.ne.s32.totalorder %s221, %s223
      %p230 = scmp.eq.s32.totalorder %s26, 3
      %p231 = por %p229, %p230
      %p232 = scmp.ne.s32.totalorder %s223, %s224
      %p233 = scmp.eq.s32.totalorder %s26, 0
      %p234 = por %p232, %p233
      %p235 = scmp.ne.s32.totalorder %s223, %s224
      %p236 = scmp.eq.s32.totalorder %s27, 3
      %p237 = por %p235, %p236
      %p239 = scmp.ne.s32.totalorder %s224, %s238
      %p240 = scmp.eq.s32.totalorder %s27, 0
      %p241 = por %p239, %p240
      %s242 = ssub.s32 %s28, %s40
      %s243 = ssub.s32 %s29, %s36
      %s244 = sor.u32 %s242, %s243
      %p245 = scmp.eq.s32.totalorder %s244, 0
      %s247 = sadd.s32 %s246, 1
      %s248 = scalar_select %p245, %s246, %s247
      %p251 = pneg %p245
      %p252 = scmp.eq.s32.totalorder %s21, 3
      %p253 = por %p251, %p252
      %p254 = scmp.ne.s32.totalorder %s246, %s249
      %p255 = scmp.eq.s32.totalorder %s21, 0
      %p256 = por %p254, %p255
      %p257 = scmp.ne.s32.totalorder %s246, %s249
      %p258 = scmp.eq.s32.totalorder %s26, 3
      %p259 = por %p257, %p258
      %p260 = scmp.ne.s32.totalorder %s249, %s250
      %p261 = scmp.eq.s32.totalorder %s26, 0
      %p262 = por %p260, %p261
      %p263 = scmp.ne.s32.totalorder %s249, %s250
      %p264 = scmp.eq.s32.totalorder %s27, 3
      %p265 = por %p263, %p264
      %p267 = scmp.ne.s32.totalorder %s250, %s266
      %p268 = scmp.eq.s32.totalorder %s27, 0
      %p269 = por %p267, %p268
      %p270 = scmp.le.s32.totalorder 1, %s21
      %p271 = scmp.lt.s32.totalorder %s21, 5
      %p272 = pnand %p270, %p271
      %p273 = pneg %p272
      // Predicated region
      $region9: #{tpu_custom_call.1} parent=5 // pred_check
        _
      $region10: #{tpu_custom_call.1} parent=5 // pred_check_branch
        %275 = sbr.rel (%p272) target = $region12
      $region11: #{tpu_custom_call.1} parent=5 // pred_region
        %s276 = ssub.s32 %s21, 1
        // Predicated region
        $region13: #{tpu_custom_call.1} parent=11 // pred_check
          %p277 = pneg %p108
        $region14: #{tpu_custom_call.1} parent=11 // pred_check_branch
          %279 = sbr.rel (%p277) target = $region16
        $region15: #{tpu_custom_call.1} parent=11 // pred_region
          _
        $region16: #{tpu_custom_call.1} parent=11 // pred_fallthru
          _
        // Predicated region
        $region17: #{tpu_custom_call.1} parent=11 // pred_check
          %p280 = pneg %p129
        $region18: #{tpu_custom_call.1} parent=11 // pred_check_branch
          %282 = sbr.rel (%p280) target = $region20
        $region19: #{tpu_custom_call.1} parent=11 // pred_region
          _
        $region20: #{tpu_custom_call.1} parent=11 // pred_fallthru
          _
        // Predicated region
        $region21: #{tpu_custom_call.1} parent=11 // pred_check
          %p283 = pneg %p150
        $region22: #{tpu_custom_call.1} parent=11 // pred_check_branch
          %285 = sbr.rel (%p283) target = $region24
        $region23: #{tpu_custom_call.1} parent=11 // pred_region
          _
        $region24: #{tpu_custom_call.1} parent=11 // pred_fallthru
          _
        // Predicated region
        $region25: #{tpu_custom_call.1} parent=11 // pred_check
          %p286 = pneg %p171
        $region26: #{tpu_custom_call.1} parent=11 // pred_check_branch
          %288 = sbr.rel (%p286) target = $region28
        $region27: #{tpu_custom_call.1} parent=11 // pred_region
          _
        $region28: #{tpu_custom_call.1} parent=11 // pred_fallthru
          _
        // Predicated region
        $region29: #{tpu_custom_call.1} parent=11 // pred_check
          %p289 = pneg %p192
        $region30: #{tpu_custom_call.1} parent=11 // pred_check_branch
          %291 = sbr.rel (%p289) target = $region32
        $region31: #{tpu_custom_call.1} parent=11 // pred_region
          _
        $region32: #{tpu_custom_call.1} parent=11 // pred_fallthru
          _
        // Predicated region
        $region33: #{tpu_custom_call.1} parent=11 // pred_check
          %p292 = pneg %p213
        $region34: #{tpu_custom_call.1} parent=11 // pred_check_branch
          %294 = sbr.rel (%p292) target = $region36
        $region35: #{tpu_custom_call.1} parent=11 // pred_region
          _
        $region36: #{tpu_custom_call.1} parent=11 // pred_fallthru
          _
        // Predicated region
        $region37: #{tpu_custom_call.1} parent=11 // pred_check
          %p295 = pneg %p234
        $region38: #{tpu_custom_call.1} parent=11 // pred_check_branch
          %297 = sbr.rel (%p295) target = $region40
        $region39: #{tpu_custom_call.1} parent=11 // pred_region
          _
        $region40: #{tpu_custom_call.1} parent=11 // pred_fallthru
          _
      $region12: #{tpu_custom_call.1} parent=5 // pred_fallthru
        _
      %p298 = scmp.lt.s32.totalorder %s21, 4
      // Predicated region
      $region41: #{tpu_custom_call.1} parent=5 // pred_check
        %p299 = pneg %p298
      $region42: #{tpu_custom_call.1} parent=5 // pred_check_branch
        %301 = sbr.rel (%p299) target = $region44
      $region43: #{tpu_custom_call.1} parent=5 // pred_region
        // Predicated region
        $region45: #{tpu_custom_call.1} parent=43 // pred_check
          %p302 = pneg %p55
        $region46: #{tpu_custom_call.1} parent=43 // pred_check_branch
          %304 = sbr.rel (%p302) target = $region48
        $region47: #{tpu_custom_call.1} parent=43 // pred_region
          %s305 = sand.u32 %s45, 1
          %s306 = scalar_lea.sflag [#allocation3], %s305
          %s307 = sand.u32 %s45, 1
          %s308 = smul.addr %s307, 32
          %s309 = scalar_lea.vmem [#allocation2], %s308
          %s310 = smul.u32 4, %s29
          %s312 = ssub.s32 512, 512
          %313 = vsyncadd %s306, %s312
          %s314 = smul.addr %s28, 8
          %s315 = sadd.s32 %s310, %s314
          %s316 = smul.addr %s315, 128
          %s317 = scalar_lea.hbm %s0, %s316
          %s319 = sshll.u32 %s309, 4
          %s320 = int_to_ptr.vmem [resolvable:$true] %s319
          %322 = dma.hbm_to_vmem [thread:$0]  %s317, 512, %s320, %s306
        $region48: #{tpu_custom_call.1} parent=43 // pred_fallthru
          _
        // Predicated region
        $region49: #{tpu_custom_call.1} parent=43 // pred_check
          %p323 = pneg %p81
        $region50: #{tpu_custom_call.1} parent=43 // pred_check_branch
          %325 = sbr.rel (%p323) target = $region52
        $region51: #{tpu_custom_call.1} parent=43 // pred_region
          %p326 = scmp.lt.s32.totalorder %s28, 1
          %s327 = scalar_select %p326, %s28, 1
          %s328 = smul.addr %s327, 4
          %s329 = scalar_lea.vmem %s1, %s328
        $region52: #{tpu_custom_call.1} parent=43 // pred_fallthru
          _
      $region44: #{tpu_custom_call.1} parent=5 // pred_fallthru
        _
      %p330 = scmp.le.s32.totalorder 1, %s21
      %p331 = scmp.lt.s32.totalorder %s21, 5
      %p332 = pnand %p330, %p331
      %p333 = pneg %p332
      // Predicated region
      $region53: #{tpu_custom_call.1} parent=5 // pred_check
        _
      $region54: #{tpu_custom_call.1} parent=5 // pred_check_branch
        %335 = sbr.rel (%p332) target = $region56
      $region55: #{tpu_custom_call.1} parent=5 // pred_region
        %s336 = ssub.s32 %s21, 1
        %s337 = sand.u32 %s48, 1
        %s338 = scalar_lea.sflag [#allocation3], %s337
        %s339 = sand.u32 %s48, 1
        %s340 = smul.addr %s339, 32
        %s341 = scalar_lea.vmem [#allocation2], %s340
        // Predicated region
        $region57: #{tpu_custom_call.1} parent=55 // pred_check
          %p342 = pneg %p61
        $region58: #{tpu_custom_call.1} parent=55 // pred_check_branch
          %344 = sbr.rel (%p342) target = $region60
        $region59: #{tpu_custom_call.1} parent=55 // pred_region
          %345 = dma.done %s338, 512
        $region60: #{tpu_custom_call.1} parent=55 // pred_fallthru
          _
        %s346 = sand.u32 %s48, 1
        %s347 = scalar_lea.sflag [#allocation3], %s346
        %s348 = sand.u32 %s48, 1
        %s349 = smul.addr %s348, 32
        %s350 = scalar_lea.vmem [#allocation2], %s349
        %p351 = pneg %p61
        %p352 = pneg %p58
        %p353 = scmp.lt.s32.totalorder %s30, 1
        %s354 = scalar_select %p353, %s30, 1
        %s355 = smul.addr %s354, 4
        %s356 = scalar_lea.vmem %s1, %s355
        %p357 = pneg %p87
        %p358 = pneg %p84
        %p359 = pneg %p108
        %p360 = pneg %p105
        %p361 = pneg %p129
        %p362 = pneg %p126
        %p363 = pneg %p150
        %p364 = pneg %p147
        %p365 = pneg %p171
        %p366 = pneg %p168
        %p367 = pneg %p192
        %p368 = pneg %p189
        %p369 = pneg %p213
        %p370 = pneg %p210
        %p371 = pneg %p234
        %p372 = pneg %p231
        %p373 = pneg %p262
        %p374 = pneg %p259
        %s375 = sand.u32 %s249, 1
        %s376 = scalar_lea.sflag [#allocation4], %s375
        %s377 = sand.u32 %s249, 1
        %s378 = smul.addr %s377, 8
        %s379 = scalar_lea.vmem [#allocation5], %s378
        %s380 = smul.u32 4, %s31
        %p381 = scmp.lt.s32.totalorder %s30, 1
        %s382 = scalar_select %p381, %s30, 1
        %s383 = smul.addr %s382, 4
        %s384 = scalar_lea.vmem %s1, %s383
        %s385 = smul.u32 4, %s31
        %v386 = vld [vmem:[%s341] sm:$0xff]
        %v387 = vld [vmem:[%s341 + $0x8] sm:$0xff]
        %v388 = vld [vmem:[%s341 + $0x10] sm:$0xff]
        %v389 = vld [vmem:[%s341 + $0x18] sm:$0xff]
        %v390 = vld [vmem:[%s384] sm:$0xf]
        %v391 = vld [vmem:[%s3] sm:$0xff]
        %v392 = vld [vmem:[%s3 + $0x8] sm:$0xff]
        %v393 = vld [vmem:[%s4] sm:$0xff]
        %v394 = vld [vmem:[%s4 + $0x8] sm:$0xff]
        %vm395 = vcmask 31744
        %v397 = vsel %vm395, %v391, 0
        %v400 = vsel %vm395, %v392, 0
        %vm402 = vcmask 1043456
        %v404 = vsel %vm402, %v390, 0
        %406 = vmatprep.subr.mxu0 0.0
        %407 = vmatpush1.msra.mxu0 0.0
        %408 = vmatprep.subr.mxu0 0.0
        %409 = vmatpush1.msra.mxu0 0.0
        %410 = vmatprep.subr.mxu0 0.0
        %411 = vmatpush1.msra.mxu0 0.0
        %412 = vmatprep.subr.mxu0 0.0
        %413 = vmatpush1.msra.mxu0 0.0
        %414 = vmatprep.subr.mxu0 0.0
        %415 = vmatpush1.msra.mxu0 0.0
        %416 = vmatprep.subr.mxu0 0.0
        %417 = vmatpush1.msra.mxu0 0.0
        %418 = vmatprep.subr.mxu0 0.0
        %419 = vmatpush1.msra.mxu0 0.0
        %420 = vmatprep.subr.mxu0 0.0
        %421 = vmatpush1.msra.mxu0 0.0
        %422 = vmatprep.subr.mxu0 0.0
        %423 = vmatpush1.msra.mxu0 0.0
        %424 = vmatprep.subr.mxu0 0.0
        %425 = vmatpush1.msra.mxu0 0.0
        %426 = vmatprep.subr.mxu0 0.0
        %427 = vmatpush1.msra.mxu0 0.0
        %428 = vmatprep.subr.mxu0 0.0
        %429 = vmatpush1.msra.mxu0 0.0
        %430 = vmatprep.subr.mxu0 0.0
        %431 = vmatpush1.msra.mxu0 0.0
        %432 = vmatprep.subr.mxu0 0.0
        %433 = vmatpush1.msra.mxu0 0.0
        %434 = vmatprep.subr.mxu0 0.0
        %435 = vmatpush1.msra.mxu0 0.0
        %436 = vmatprep.subr.mxu0 0.0
        %437 = vmatpush1.msra.mxu0 %v404
        %438 = vmatprep.subr.mxu0 0.0
        %439 = vmatpush2.msra.mxu0 0.0
        %440 = vmatprep.subr.mxu0 0.0
        %441 = vmatpush2.msra.mxu0 0.0
        %442 = vmatprep.subr.mxu0 0.0
        %443 = vmatpush2.msra.mxu0 0.0
        %444 = vmatprep.subr.mxu0 0.0
        %445 = vmatpush2.msra.mxu0 0.0
        %446 = vmatprep.subr.mxu0 0.0
        %447 = vmatpush2.msra.mxu0 0.0
        %448 = vmatprep.subr.mxu0 0.0
        %449 = vmatpush2.msra.mxu0 0.0
        %450 = vmatprep.subr.mxu0 0.0
        %451 = vmatpush2.msra.mxu0 0.0
        %452 = vmatprep.subr.mxu0 0.0
        %453 = vmatpush2.msra.mxu0 0.0
        %454 = vmatprep.subr.mxu0 0.0
        %455 = vmatpush2.msra.mxu0 0.0
        %456 = vmatprep.subr.mxu0 0.0
        %457 = vmatpush2.msra.mxu0 0.0
        %458 = vmatprep.subr.mxu0 0.0
        %459 = vmatpush2.msra.mxu0 0.0
        %460 = vmatprep.subr.mxu0 0.0
        %461 = vmatpush2.msra.mxu0 0.0
        %462 = vmatprep.subr.mxu0 0.0
        %463 = vmatpush2.msra.mxu0 0.0
        %464 = vmatprep.subr.mxu0 0.0
        %465 = vmatpush2.msra.mxu0 0.0
        %466 = vmatprep.subr.mxu0 0.0
        %467 = vmatpush2.msra.mxu0 0.0
        %468 = vmatprep.subr.mxu0 0.0
        %469 = vmatpush2.msra.mxu0 0.0
        %470 = vmatprep.mubr.f32.mxu0 0.0
        %471 = vmatmul.mubr.f32.gmra.mxu0 %v397
        %v472 = vpop.f32.mrf.mxu0
        %v473 = vadd.f32 %v393, %v472
        %v474 = vpop.f32.mrf.mxu0
        %475 = vmatprep.mubr.f32.mxu0 0.0
        %476 = vmatmul.mubr.f32.gmra.mxu0 %v400
        %v477 = vpop.f32.mrf.mxu0
        %v478 = vadd.f32 %v394, %v477
        %v479 = vpop.f32.mrf.mxu0
        %480 = vdwg.mxu0
        %v481 = vld [vmem:[%s2] sm:$0xff]
        %v482 = vld [vmem:[%s2 + $0x8] sm:$0xff]
        %484 = vset.pattern.permute.xlu0 0
        %485 = vperm.xlu0 %484, %v473
        %v486 = vpop.permute.xlu0 %485
        %489 = vset.pattern.permute.xlu0 0
        %490 = vperm.xlu0 %489, %v478
        %v491 = vpop.permute.xlu0 %490
        %vm493 = vcmask 64512
        %v495 = vsel %vm493, %v481, 0
        %v498 = vsel %vm493, %v482, 0
        %500 = vmatprep.subr.mxu0 0.0
        %501 = vmatpush1.msra.mxu0 0.0
        %502 = vmatprep.subr.mxu0 0.0
        %503 = vmatpush1.msra.mxu0 0.0
        %504 = vmatprep.subr.mxu0 0.0
        %505 = vmatpush1.msra.mxu0 0.0
        %506 = vmatprep.subr.mxu0 0.0
        %507 = vmatpush1.msra.mxu0 0.0
        %508 = vmatprep.subr.mxu0 0.0
        %509 = vmatpush1.msra.mxu0 0.0
        %510 = vmatprep.subr.mxu0 0.0
        %511 = vmatpush1.msra.mxu0 0.0
        %512 = vmatprep.subr.mxu0 0.0
        %513 = vmatpush1.msra.mxu0 0.0
        %514 = vmatprep.subr.mxu0 0.0
        %515 = vmatpush1.msra.mxu0 0.0
        %516 = vmatprep.subr.mxu0 0.0
        %517 = vmatpush1.msra.mxu0 0.0
        %518 = vmatprep.subr.mxu0 0.0
        %519 = vmatpush1.msra.mxu0 0.0
        %520 = vmatprep.subr.mxu0 0.0
        %521 = vmatpush1.msra.mxu0 0.0
        %522 = vmatprep.subr.mxu0 0.0
        %523 = vmatpush1.msra.mxu0 0.0
        %524 = vmatprep.subr.mxu0 0.0
        %525 = vmatpush1.msra.mxu0 0.0
        %526 = vmatprep.subr.mxu0 0.0
        %527 = vmatpush1.msra.mxu0 0.0
        %528 = vmatprep.subr.mxu0 0.0
        %529 = vmatpush1.msra.mxu0 0.0
        %530 = vmatprep.subr.mxu0 %v387
        %531 = vmatpush1.msra.mxu0 %v386
        %532 = vmatprep.subr.mxu0 0.0
        %533 = vmatpush2.msra.mxu0 0.0
        %534 = vmatprep.subr.mxu0 0.0
        %535 = vmatpush2.msra.mxu0 0.0
        %536 = vmatprep.subr.mxu0 0.0
        %537 = vmatpush2.msra.mxu0 0.0
        %538 = vmatprep.subr.mxu0 0.0
        %539 = vmatpush2.msra.mxu0 0.0
        %540 = vmatprep.subr.mxu0 0.0
        %541 = vmatpush2.msra.mxu0 0.0
        %542 = vmatprep.subr.mxu0 0.0
        %543 = vmatpush2.msra.mxu0 0.0
        %544 = vmatprep.subr.mxu0 0.0
        %545 = vmatpush2.msra.mxu0 0.0
        %546 = vmatprep.subr.mxu0 0.0
        %547 = vmatpush2.msra.mxu0 0.0
        %548 = vmatprep.subr.mxu0 0.0
        %549 = vmatpush2.msra.mxu0 0.0
        %550 = vmatprep.subr.mxu0 0.0
        %551 = vmatpush2.msra.mxu0 0.0
        %552 = vmatprep.subr.mxu0 0.0
        %553 = vmatpush2.msra.mxu0 0.0
        %554 = vmatprep.subr.mxu0 0.0
        %555 = vmatpush2.msra.mxu0 0.0
        %556 = vmatprep.subr.mxu0 0.0
        %557 = vmatpush2.msra.mxu0 0.0
        %558 = vmatprep.subr.mxu0 0.0
        %559 = vmatpush2.msra.mxu0 0.0
        %560 = vmatprep.subr.mxu0 0.0
        %561 = vmatpush2.msra.mxu0 0.0
        %562 = vmatprep.subr.mxu0 0.0
        %563 = vmatpush2.msra.mxu0 0.0
        %564 = vmatprep.mubr.f32.mxu0 0.0
        %565 = vmatmul.mubr.f32.gmra.mxu0 %v495
        %v566 = vpop.f32.mrf.mxu0
        %v567 = vadd.f32 %v486, %v566
        %v568 = vpop.f32.mrf.mxu0
        %v569 = vadd.f32 %v486, %v568
        %570 = vmatprep.mubr.f32.mxu0 0.0
        %571 = vmatmul.mubr.f32.gmra.mxu0 %v498
        %v572 = vpop.f32.mrf.mxu0
        %v573 = vadd.f32 %v491, %v572
        %v574 = vpop.f32.mrf.mxu0
        %v575 = vadd.f32 %v491, %v574
        %576 = vdwg.mxu0
        %577 = vmatprep.subr.mxu0 0.0
        %578 = vmatpush1.msra.mxu0 0.0
        %579 = vmatprep.subr.mxu0 0.0
        %580 = vmatpush1.msra.mxu0 0.0
        %581 = vmatprep.subr.mxu0 0.0
        %582 = vmatpush1.msra.mxu0 0.0
        %583 = vmatprep.subr.mxu0 0.0
        %584 = vmatpush1.msra.mxu0 0.0
        %585 = vmatprep.subr.mxu0 0.0
        %586 = vmatpush1.msra.mxu0 0.0
        %587 = vmatprep.subr.mxu0 0.0
        %588 = vmatpush1.msra.mxu0 0.0
        %589 = vmatprep.subr.mxu0 0.0
        %590 = vmatpush1.msra.mxu0 0.0
        %591 = vmatprep.subr.mxu0 0.0
        %592 = vmatpush1.msra.mxu0 0.0
        %593 = vmatprep.subr.mxu0 0.0
        %594 = vmatpush1.msra.mxu0 0.0
        %595 = vmatprep.subr.mxu0 0.0
        %596 = vmatpush1.msra.mxu0 0.0
        %597 = vmatprep.subr.mxu0 0.0
        %598 = vmatpush1.msra.mxu0 0.0
        %599 = vmatprep.subr.mxu0 0.0
        %600 = vmatpush1.msra.mxu0 0.0
        %601 = vmatprep.subr.mxu0 0.0
        %602 = vmatpush1.msra.mxu0 0.0
        %603 = vmatprep.subr.mxu0 0.0
        %604 = vmatpush1.msra.mxu0 0.0
        %605 = vmatprep.subr.mxu0 0.0
        %606 = vmatpush1.msra.mxu0 0.0
        %607 = vmatprep.subr.mxu0 %v389
        %608 = vmatpush1.msra.mxu0 %v388
        %609 = vmatprep.subr.mxu0 0.0
        %610 = vmatpush2.msra.mxu0 0.0
        %611 = vmatprep.subr.mxu0 0.0
        %612 = vmatpush2.msra.mxu0 0.0
        %613 = vmatprep.subr.mxu0 0.0
        %614 = vmatpush2.msra.mxu0 0.0
        %615 = vmatprep.subr.mxu0 0.0
        %616 = vmatpush2.msra.mxu0 0.0
        %617 = vmatprep.subr.mxu0 0.0
        %618 = vmatpush2.msra.mxu0 0.0
        %619 = vmatprep.subr.mxu0 0.0
        %620 = vmatpush2.msra.mxu0 0.0
        %621 = vmatprep.subr.mxu0 0.0
        %622 = vmatpush2.msra.mxu0 0.0
        %623 = vmatprep.subr.mxu0 0.0
        %624 = vmatpush2.msra.mxu0 0.0
        %625 = vmatprep.subr.mxu0 0.0
        %626 = vmatpush2.msra.mxu0 0.0
        %627 = vmatprep.subr.mxu0 0.0
        %628 = vmatpush2.msra.mxu0 0.0
        %629 = vmatprep.subr.mxu0 0.0
        %630 = vmatpush2.msra.mxu0 0.0
        %631 = vmatprep.subr.mxu0 0.0
        %632 = vmatpush2.msra.mxu0 0.0
        %633 = vmatprep.subr.mxu0 0.0
        %634 = vmatpush2.msra.mxu0 0.0
        %635 = vmatprep.subr.mxu0 0.0
        %636 = vmatpush2.msra.mxu0 0.0
        %637 = vmatprep.subr.mxu0 0.0
        %638 = vmatpush2.msra.mxu0 0.0
        %639 = vmatprep.subr.mxu0 0.0
        %640 = vmatpush2.msra.mxu0 0.0
        %641 = vmatprep.mubr.f32.mxu0 0.0
        %642 = vmatmul.mubr.f32.gmra.mxu0 %v495
        %v643 = vpop.f32.mrf.mxu0
        %v644 = vadd.f32 %v486, %v643
        %v645 = vpop.f32.mrf.mxu0
        %v646 = vadd.f32 %v486, %v645
        %647 = vmatprep.mubr.f32.mxu0 0.0
        %648 = vmatmul.mubr.f32.gmra.mxu0 %v498
        %v649 = vpop.f32.mrf.mxu0
        %v650 = vadd.f32 %v491, %v649
        %v651 = vpop.f32.mrf.mxu0
        %v652 = vadd.f32 %v491, %v651
        %653 = vdwg.mxu0
        %v654 = vmax.f32 %v567, 0.0
        %v655 = vmax.f32 %v569, 0.0
        %v656 = vmax.f32 %v644, 0.0
        %v657 = vmax.f32 %v646, 0.0
        %v658 = vmax.f32 %v573, 0.0
        %v659 = vmax.f32 %v575, 0.0
        %v660 = vmax.f32 %v650, 0.0
        %v661 = vmax.f32 %v652, 0.0
        %v662 = vld [vmem:[%s5] sm:$0xff]
        %v663 = vld [vmem:[%s5 + $0x8] sm:$0xff]
        %v664 = vld [vmem:[%s6] sm:$0xff]
        %v665 = vld [vmem:[%s6 + $0x8] sm:$0xff]
        %667 = vset.pattern.permute.xlu0 0
        %668 = vperm.xlu0 %667, %v664
        %v669 = vpop.permute.xlu0 %668
        %672 = vset.pattern.permute.xlu0 0
        %673 = vperm.xlu0 %672, %v665
        %v674 = vpop.permute.xlu0 %673
        %vm676 = vcmask 130048
        %v678 = vsel %vm676, %v662, 0
        %v681 = vsel %vm676, %v663, 0
        %683 = vmatprep.subr.mxu0 0.0
        %684 = vmatpush1.msra.mxu0 0.0
        %685 = vmatprep.subr.mxu0 0.0
        %686 = vmatpush1.msra.mxu0 0.0
        %687 = vmatprep.subr.mxu0 0.0
        %688 = vmatpush1.msra.mxu0 0.0
        %689 = vmatprep.subr.mxu0 0.0
        %690 = vmatpush1.msra.mxu0 0.0
        %691 = vmatprep.subr.mxu0 0.0
        %692 = vmatpush1.msra.mxu0 0.0
        %693 = vmatprep.subr.mxu0 0.0
        %694 = vmatpush1.msra.mxu0 0.0
        %695 = vmatprep.subr.mxu0 0.0
        %696 = vmatpush1.msra.mxu0 0.0
        %697 = vmatprep.subr.mxu0 0.0
        %698 = vmatpush1.msra.mxu0 0.0
        %699 = vmatprep.subr.mxu0 0.0
        %700 = vmatpush1.msra.mxu0 0.0
        %701 = vmatprep.subr.mxu0 0.0
        %702 = vmatpush1.msra.mxu0 0.0
        %703 = vmatprep.subr.mxu0 0.0
        %704 = vmatpush1.msra.mxu0 0.0
        %705 = vmatprep.subr.mxu0 0.0
        %706 = vmatpush1.msra.mxu0 0.0
        %707 = vmatprep.subr.mxu0 0.0
        %708 = vmatpush1.msra.mxu0 0.0
        %709 = vmatprep.subr.mxu0 0.0
        %710 = vmatpush1.msra.mxu0 0.0
        %711 = vmatprep.subr.mxu0 %v659
        %712 = vmatpush1.msra.mxu0 %v658
        %713 = vmatprep.subr.mxu0 %v655
        %714 = vmatpush1.msra.mxu0 %v654
        %715 = vmatprep.subr.mxu0 0.0
        %716 = vmatpush2.msra.mxu0 0.0
        %717 = vmatprep.subr.mxu0 0.0
        %718 = vmatpush2.msra.mxu0 0.0
        %719 = vmatprep.subr.mxu0 0.0
        %720 = vmatpush2.msra.mxu0 0.0
        %721 = vmatprep.subr.mxu0 0.0
        %722 = vmatpush2.msra.mxu0 0.0
        %723 = vmatprep.subr.mxu0 0.0
        %724 = vmatpush2.msra.mxu0 0.0
        %725 = vmatprep.subr.mxu0 0.0
        %726 = vmatpush2.msra.mxu0 0.0
        %727 = vmatprep.subr.mxu0 0.0
        %728 = vmatpush2.msra.mxu0 0.0
        %729 = vmatprep.subr.mxu0 0.0
        %730 = vmatpush2.msra.mxu0 0.0
        %731 = vmatprep.subr.mxu0 0.0
        %732 = vmatpush2.msra.mxu0 0.0
        %733 = vmatprep.subr.mxu0 0.0
        %734 = vmatpush2.msra.mxu0 0.0
        %735 = vmatprep.subr.mxu0 0.0
        %736 = vmatpush2.msra.mxu0 0.0
        %737 = vmatprep.subr.mxu0 0.0
        %738 = vmatpush2.msra.mxu0 0.0
        %739 = vmatprep.subr.mxu0 0.0
        %740 = vmatpush2.msra.mxu0 0.0
        %741 = vmatprep.subr.mxu0 0.0
        %742 = vmatpush2.msra.mxu0 0.0
        %743 = vmatprep.subr.mxu0 0.0
        %744 = vmatpush2.msra.mxu0 0.0
        %745 = vmatprep.subr.mxu0 0.0
        %746 = vmatpush2.msra.mxu0 0.0
        %747 = vmatprep.mubr.f32.mxu0 0.0
        %748 = vmatmul.mubr.f32.gmra.mxu0 %v678
        %v749 = vpop.f32.mrf.mxu0
        %v750 = vadd.f32 %v669, %v749
        %v751 = vpop.f32.mrf.mxu0
        %v752 = vadd.f32 %v669, %v751
        %753 = vmatprep.mubr.f32.mxu0 0.0
        %754 = vmatmul.mubr.f32.gmra.mxu0 %v681
        %v755 = vpop.f32.mrf.mxu0
        %v756 = vadd.f32 %v674, %v755
        %v757 = vpop.f32.mrf.mxu0
        %v758 = vadd.f32 %v674, %v757
        %759 = vdwg.mxu0
        %760 = vmatprep.subr.mxu0 0.0
        %761 = vmatpush1.msra.mxu0 0.0
        %762 = vmatprep.subr.mxu0 0.0
        %763 = vmatpush1.msra.mxu0 0.0
        %764 = vmatprep.subr.mxu0 0.0
        %765 = vmatpush1.msra.mxu0 0.0
        %766 = vmatprep.subr.mxu0 0.0
        %767 = vmatpush1.msra.mxu0 0.0
        %768 = vmatprep.subr.mxu0 0.0
        %769 = vmatpush1.msra.mxu0 0.0
        %770 = vmatprep.subr.mxu0 0.0
        %771 = vmatpush1.msra.mxu0 0.0
        %772 = vmatprep.subr.mxu0 0.0
        %773 = vmatpush1.msra.mxu0 0.0
        %774 = vmatprep.subr.mxu0 0.0
        %775 = vmatpush1.msra.mxu0 0.0
        %776 = vmatprep.subr.mxu0 0.0
        %777 = vmatpush1.msra.mxu0 0.0
        %778 = vmatprep.subr.mxu0 0.0
        %779 = vmatpush1.msra.mxu0 0.0
        %780 = vmatprep.subr.mxu0 0.0
        %781 = vmatpush1.msra.mxu0 0.0
        %782 = vmatprep.subr.mxu0 0.0
        %783 = vmatpush1.msra.mxu0 0.0
        %784 = vmatprep.subr.mxu0 0.0
        %785 = vmatpush1.msra.mxu0 0.0
        %786 = vmatprep.subr.mxu0 0.0
        %787 = vmatpush1.msra.mxu0 0.0
        %788 = vmatprep.subr.mxu0 %v661
        %789 = vmatpush1.msra.mxu0 %v660
        %790 = vmatprep.subr.mxu0 %v657
        %791 = vmatpush1.msra.mxu0 %v656
        %792 = vmatprep.subr.mxu0 0.0
        %793 = vmatpush2.msra.mxu0 0.0
        %794 = vmatprep.subr.mxu0 0.0
        %795 = vmatpush2.msra.mxu0 0.0
        %796 = vmatprep.subr.mxu0 0.0
        %797 = vmatpush2.msra.mxu0 0.0
        %798 = vmatprep.subr.mxu0 0.0
        %799 = vmatpush2.msra.mxu0 0.0
        %800 = vmatprep.subr.mxu0 0.0
        %801 = vmatpush2.msra.mxu0 0.0
        %802 = vmatprep.subr.mxu0 0.0
        %803 = vmatpush2.msra.mxu0 0.0
        %804 = vmatprep.subr.mxu0 0.0
        %805 = vmatpush2.msra.mxu0 0.0
        %806 = vmatprep.subr.mxu0 0.0
        %807 = vmatpush2.msra.mxu0 0.0
        %808 = vmatprep.subr.mxu0 0.0
        %809 = vmatpush2.msra.mxu0 0.0
        %810 = vmatprep.subr.mxu0 0.0
        %811 = vmatpush2.msra.mxu0 0.0
        %812 = vmatprep.subr.mxu0 0.0
        %813 = vmatpush2.msra.mxu0 0.0
        %814 = vmatprep.subr.mxu0 0.0
        %815 = vmatpush2.msra.mxu0 0.0
        %816 = vmatprep.subr.mxu0 0.0
        %817 = vmatpush2.msra.mxu0 0.0
        %818 = vmatprep.subr.mxu0 0.0
        %819 = vmatpush2.msra.mxu0 0.0
        %820 = vmatprep.subr.mxu0 0.0
        %821 = vmatpush2.msra.mxu0 0.0
        %822 = vmatprep.subr.mxu0 0.0
        %823 = vmatpush2.msra.mxu0 0.0
        %824 = vmatprep.mubr.f32.mxu0 0.0
        %825 = vmatmul.mubr.f32.gmra.mxu0 %v678
        %v826 = vpop.f32.mrf.mxu0
        %v827 = vadd.f32 %v669, %v826
        %v828 = vpop.f32.mrf.mxu0
        %v829 = vadd.f32 %v669, %v828
        %830 = vmatprep.mubr.f32.mxu0 0.0
        %831 = vmatmul.mubr.f32.gmra.mxu0 %v681
        %v832 = vpop.f32.mrf.mxu0
        %v833 = vadd.f32 %v674, %v832
        %v834 = vpop.f32.mrf.mxu0
        %v835 = vadd.f32 %v674, %v834
        %836 = vdwg.mxu0
        %v837 = vmax.f32 %v750, 0.0
        %v838 = vmax.f32 %v752, 0.0
        %v839 = vmax.f32 %v827, 0.0
        %v840 = vmax.f32 %v829, 0.0
        %v841 = vmax.f32 %v756, 0.0
        %v842 = vmax.f32 %v758, 0.0
        %v843 = vmax.f32 %v833, 0.0
        %v844 = vmax.f32 %v835, 0.0
        %v845 = vld [vmem:[%s7] sm:$0x3]
        %v846 = vld [vmem:[%s8] sm:$0x3]
        %848 = vset.pattern.permute.xlu0 0
        %849 = vperm.xlu0 %848, %v846
        %v850 = vpop.permute.xlu0 %849
        %v853 = vsel %vm676, %v845, 0
        %855 = vmatprep.subr.mxu0 0.0
        %856 = vmatpush1.msra.mxu0 0.0
        %857 = vmatprep.subr.mxu0 0.0
        %858 = vmatpush1.msra.mxu0 0.0
        %859 = vmatprep.subr.mxu0 0.0
        %860 = vmatpush1.msra.mxu0 0.0
        %861 = vmatprep.subr.mxu0 0.0
        %862 = vmatpush1.msra.mxu0 0.0
        %863 = vmatprep.subr.mxu0 0.0
        %864 = vmatpush1.msra.mxu0 0.0
        %865 = vmatprep.subr.mxu0 0.0
        %866 = vmatpush1.msra.mxu0 0.0
        %867 = vmatprep.subr.mxu0 0.0
        %868 = vmatpush1.msra.mxu0 0.0
        %869 = vmatprep.subr.mxu0 0.0
        %870 = vmatpush1.msra.mxu0 0.0
        %871 = vmatprep.subr.mxu0 0.0
        %872 = vmatpush1.msra.mxu0 0.0
        %873 = vmatprep.subr.mxu0 0.0
        %874 = vmatpush1.msra.mxu0 0.0
        %875 = vmatprep.subr.mxu0 0.0
        %876 = vmatpush1.msra.mxu0 0.0
        %877 = vmatprep.subr.mxu0 0.0
        %878 = vmatpush1.msra.mxu0 0.0
        %879 = vmatprep.subr.mxu0 0.0
        %880 = vmatpush1.msra.mxu0 0.0
        %881 = vmatprep.subr.mxu0 0.0
        %882 = vmatpush1.msra.mxu0 0.0
        %883 = vmatprep.subr.mxu0 %v842
        %884 = vmatpush1.msra.mxu0 %v841
        %885 = vmatprep.subr.mxu0 %v838
        %886 = vmatpush1.msra.mxu0 %v837
        %887 = vmatprep.subr.mxu0 0.0
        %888 = vmatpush2.msra.mxu0 0.0
        %889 = vmatprep.subr.mxu0 0.0
        %890 = vmatpush2.msra.mxu0 0.0
        %891 = vmatprep.subr.mxu0 0.0
        %892 = vmatpush2.msra.mxu0 0.0
        %893 = vmatprep.subr.mxu0 0.0
        %894 = vmatpush2.msra.mxu0 0.0
        %895 = vmatprep.subr.mxu0 0.0
        %896 = vmatpush2.msra.mxu0 0.0
        %897 = vmatprep.subr.mxu0 0.0
        %898 = vmatpush2.msra.mxu0 0.0
        %899 = vmatprep.subr.mxu0 0.0
        %900 = vmatpush2.msra.mxu0 0.0
        %901 = vmatprep.subr.mxu0 0.0
        %902 = vmatpush2.msra.mxu0 0.0
        %903 = vmatprep.subr.mxu0 0.0
        %904 = vmatpush2.msra.mxu0 0.0
        %905 = vmatprep.subr.mxu0 0.0
        %906 = vmatpush2.msra.mxu0 0.0
        %907 = vmatprep.subr.mxu0 0.0
        %908 = vmatpush2.msra.mxu0 0.0
        %909 = vmatprep.subr.mxu0 0.0
        %910 = vmatpush2.msra.mxu0 0.0
        %911 = vmatprep.subr.mxu0 0.0
        %912 = vmatpush2.msra.mxu0 0.0
        %913 = vmatprep.subr.mxu0 0.0
        %914 = vmatpush2.msra.mxu0 0.0
        %915 = vmatprep.subr.mxu0 0.0
        %916 = vmatpush2.msra.mxu0 0.0
        %917 = vmatprep.subr.mxu0 0.0
        %918 = vmatpush2.msra.mxu0 0.0
        %919 = vmatprep.mubr.f32.mxu0 0.0
        %920 = vmatmul.mubr.f32.gmra.mxu0 %v853
        %v921 = vpop.f32.mrf.mxu0
        %v922 = vadd.f32 %v850, %v921
        %v923 = vpop.f32.mrf.mxu0
        %v924 = vadd.f32 %v850, %v923
        %925 = vdwg.mxu0
        %926 = vmatprep.subr.mxu0 0.0
        %927 = vmatpush1.msra.mxu0 0.0
        %928 = vmatprep.subr.mxu0 0.0
        %929 = vmatpush1.msra.mxu0 0.0
        %930 = vmatprep.subr.mxu0 0.0
        %931 = vmatpush1.msra.mxu0 0.0
        %932 = vmatprep.subr.mxu0 0.0
        %933 = vmatpush1.msra.mxu0 0.0
        %934 = vmatprep.subr.mxu0 0.0
        %935 = vmatpush1.msra.mxu0 0.0
        %936 = vmatprep.subr.mxu0 0.0
        %937 = vmatpush1.msra.mxu0 0.0
        %938 = vmatprep.subr.mxu0 0.0
        %939 = vmatpush1.msra.mxu0 0.0
        %940 = vmatprep.subr.mxu0 0.0
        %941 = vmatpush1.msra.mxu0 0.0
        %942 = vmatprep.subr.mxu0 0.0
        %943 = vmatpush1.msra.mxu0 0.0
        %944 = vmatprep.subr.mxu0 0.0
        %945 = vmatpush1.msra.mxu0 0.0
        %946 = vmatprep.subr.mxu0 0.0
        %947 = vmatpush1.msra.mxu0 0.0
        %948 = vmatprep.subr.mxu0 0.0
        %949 = vmatpush1.msra.mxu0 0.0
        %950 = vmatprep.subr.mxu0 0.0
        %951 = vmatpush1.msra.mxu0 0.0
        %952 = vmatprep.subr.mxu0 0.0
        %953 = vmatpush1.msra.mxu0 0.0
        %954 = vmatprep.subr.mxu0 %v844
        %955 = vmatpush1.msra.mxu0 %v843
        %956 = vmatprep.subr.mxu0 %v840
        %957 = vmatpush1.msra.mxu0 %v839
        %958 = vmatprep.subr.mxu0 0.0
        %959 = vmatpush2.msra.mxu0 0.0
        %960 = vmatprep.subr.mxu0 0.0
        %961 = vmatpush2.msra.mxu0 0.0
        %962 = vmatprep.subr.mxu0 0.0
        %963 = vmatpush2.msra.mxu0 0.0
        %964 = vmatprep.subr.mxu0 0.0
        %965 = vmatpush2.msra.mxu0 0.0
        %966 = vmatprep.subr.mxu0 0.0
        %967 = vmatpush2.msra.mxu0 0.0
        %968 = vmatprep.subr.mxu0 0.0
        %969 = vmatpush2.msra.mxu0 0.0
        %970 = vmatprep.subr.mxu0 0.0
        %971 = vmatpush2.msra.mxu0 0.0
        %972 = vmatprep.subr.mxu0 0.0
        %973 = vmatpush2.msra.mxu0 0.0
        %974 = vmatprep.subr.mxu0 0.0
        %975 = vmatpush2.msra.mxu0 0.0
        %976 = vmatprep.subr.mxu0 0.0
        %977 = vmatpush2.msra.mxu0 0.0
        %978 = vmatprep.subr.mxu0 0.0
        %979 = vmatpush2.msra.mxu0 0.0
        %980 = vmatprep.subr.mxu0 0.0
        %981 = vmatpush2.msra.mxu0 0.0
        %982 = vmatprep.subr.mxu0 0.0
        %983 = vmatpush2.msra.mxu0 0.0
        %984 = vmatprep.subr.mxu0 0.0
        %985 = vmatpush2.msra.mxu0 0.0
        %986 = vmatprep.subr.mxu0 0.0
        %987 = vmatpush2.msra.mxu0 0.0
        %988 = vmatprep.subr.mxu0 0.0
        %989 = vmatpush2.msra.mxu0 0.0
        %990 = vmatprep.mubr.f32.mxu0 0.0
        %991 = vmatmul.mubr.f32.gmra.mxu0 %v853
        %v992 = vpop.f32.mrf.mxu0
        %v993 = vadd.f32 %v850, %v992
        %v994 = vpop.f32.mrf.mxu0
        %v995 = vadd.f32 %v850, %v994
        %996 = vdwg.mxu0
        %v1001 = vcombine.low %v922, %v924
        %v1002 = vcombine.low %v993, %v995
        %v1004 = vunpack.c.l.s4 1983009808
        %v1005 = vunpack.c.0.s8 %v1004
        %v1006 = vlaneseq
        %v1007 = vshrl.u32 %v1006, 7
        %v1008 = vsub.s32 %v1005, %v1007
        %v1009 = vrot.slane %v1001, %v1008
        %v1011 = vunpack.c.l.s4 1983009808
        %v1012 = vunpack.c.0.s8 %v1011
        %v1013 = vlaneseq
        %v1014 = vshrl.u32 %v1013, 7
        %v1015 = vsub.s32 %v1012, %v1014
        %v1016 = vrot.slane %v1002, %v1015
        %v1017 = vcombine.low %v1009, %v1016
        %1019 = vst [vmem:[%s379] sm:$0xff] %v1017
        %s1020 = sand.u32 %s249, 1
        %s1021 = scalar_lea.sflag [#allocation4], %s1020
        %s1022 = sand.u32 %s249, 1
        %s1023 = smul.addr %s1022, 8
        %s1024 = scalar_lea.vmem [#allocation5], %s1023
        // Predicated region
        $region61: #{tpu_custom_call.1} parent=55 // pred_check
          %p1025 = pneg %p259
        $region62: #{tpu_custom_call.1} parent=55 // pred_check_branch
          %1027 = sbr.rel (%p1025) target = $region64
        $region63: #{tpu_custom_call.1} parent=55 // pred_region
          %s1028 = smul.u32 4, %s31
          %s1030 = ssub.s32 128, 128
          %1031 = vsyncadd %s1021, %s1030
          %s1032 = smul.addr %s30, 8
          %s1033 = sadd.s32 %s1028, %s1032
          %s1034 = smul.addr %s1033, 32
          %s1035 = scalar_lea.hbm %s9, %s1034
          %s1037 = sshll.u32 %s1024, 4
          %s1038 = int_to_ptr.vmem [resolvable:$true] %s1037
          %1040 = dma.vmem_to_hbm [thread:$0]  %s1038, 128, %s1035, %s1021
        $region64: #{tpu_custom_call.1} parent=55 // pred_fallthru
          _
      $region56: #{tpu_custom_call.1} parent=5 // pred_fallthru
        _
      %p1041 = scmp.le.s32.totalorder 2, %s21
      // Predicated region
      $region65: #{tpu_custom_call.1} parent=5 // pred_check
        %p1042 = pneg %p1041
      $region66: #{tpu_custom_call.1} parent=5 // pred_check_branch
        %1044 = sbr.rel (%p1042) target = $region68
      $region67: #{tpu_custom_call.1} parent=5 // pred_region
        %s1045 = ssub.s32 %s21, 2
        // Predicated region
        $region69: #{tpu_custom_call.1} parent=67 // pred_check
          %p1046 = pneg %p265
        $region70: #{tpu_custom_call.1} parent=67 // pred_check_branch
          %1048 = sbr.rel (%p1046) target = $region72
        $region71: #{tpu_custom_call.1} parent=67 // pred_region
          %s1049 = sand.u32 %s250, 1
          %s1050 = scalar_lea.sflag [#allocation4], %s1049
          %s1051 = sand.u32 %s250, 1
          %s1052 = smul.addr %s1051, 8
          %s1053 = scalar_lea.vmem [#allocation5], %s1052
          %1054 = dma.done %s1050, 128
        $region72: #{tpu_custom_call.1} parent=67 // pred_fallthru
          _
      $region68: #{tpu_custom_call.1} parent=5 // pred_fallthru
        _
    $region6: #{tpu_custom_call.1} parent=1 // loop_footer
      %s25 = sadd.s32 1, %s21
    $region7: #{tpu_custom_call.1} parent=1 // loop_footer_branch
      %20 = sbr.rel target = $region3
    $region8: #{tpu_custom_call.1} parent=1 // loop_exit
      _
    %1055 = vsyncpa [#allocation3], 1
    %s1056 = scalar_lea.sflag [#allocation3], 1
    %1057 = vsyncpa %s1056, 1
    %1058 = vsyncpa [#allocation4], 1
    %s1059 = scalar_lea.sflag [#allocation4], 1
    %1060 = vsyncpa %s1059, 1

</llo_original>
